<compile_context>
chip_gen: v6e
topology: v6e:2x2x1
jax: 0.10.0
libtpu: 0.0.40
codegen_flags: <defaults>
</compile_context>

<pallas_src>
import functools

import jax
import jax.numpy as jnp
from jax.experimental import pallas as pl
from jax.experimental.pallas import tpu as pltpu


# ---------------------------------------------------------------------------
# Kernels
# ---------------------------------------------------------------------------
def _fused_kernel(x_ref, w1_ref, b1_ref, w2t_ref, b2_ref, o_ref, *, inv_hw):
    """Whole SE block for one image: pool -> MLP -> hard-sigmoid -> rescale.

    x_ref/o_ref: (1, C, HW); w1: (C, Cmid); b1: (1, Cmid); w2t: (C, Cmid);
    b2: (C, 1).  All params fp32.
    """
    x = x_ref[0]                                                        # (C, HW)
    pooled = jnp.sum(x.astype(jnp.float32), axis=-1, keepdims=True) * inv_hw   # (C, 1)
    # conv1 (1x1) + ReLU : sum over C (sublane reduce).
    h = jnp.maximum(
        jnp.sum(pooled * w1_ref[...], axis=0, keepdims=True) + b1_ref[...], 0.0)  # (1, Cmid)
    # conv2 (1x1) : sum over Cmid (lane reduce), keeps C on sublanes.
    a = jnp.sum(w2t_ref[...] * h, axis=-1, keepdims=True) + b2_ref[...]           # (C, 1)
    attn = jnp.clip(1.2 * a + 3.0, 0.0, 6.0) * (1.0 / 6.0)              # paddle hard-sigmoid
    o_ref[0] = x * attn.astype(x.dtype)


def _pool_attn_kernel(x_ref, w1_ref, b1_ref, w2t_ref, b2_ref, attn_ref, acc_ref,
                      *, hw, tile, mask):
    """Streaming pass 1: per-channel spatial sum + (last step) excitation MLP.

    x_ref: (1, C, T); attn_ref: (1, C, 1) fp32 output; acc_ref: (1, C, 1) fp32 scratch.
    """
    t = pl.program_id(1)

    @pl.when(t == 0)
    def _():
        acc_ref[...] = jnp.zeros_like(acc_ref)

    x = x_ref[...].astype(jnp.float32)                                  # (1, C, T)
    if mask:  # static: only when HW % tile != 0 — zero out the padded lanes
        lane = jax.lax.broadcasted_iota(jnp.int32, x.shape, 2)
        x = jnp.where(lane < (hw - t * tile), x, 0.0)
    acc_ref[...] += jnp.sum(x, axis=-1, keepdims=True)

    @pl.when(t == pl.num_programs(1) - 1)
    def _():
        pooled = acc_ref[0] * (1.0 / hw)                                # (C, 1)
        h = jnp.maximum(
            jnp.sum(pooled * w1_ref[...], axis=0, keepdims=True) + b1_ref[...], 0.0)
        a = jnp.sum(w2t_ref[...] * h, axis=-1, keepdims=True) + b2_ref[...]
        attn_ref[0] = jnp.clip(1.2 * a + 3.0, 0.0, 6.0) * (1.0 / 6.0)


def _scale_kernel(x_ref, attn_ref, o_ref):
    """Streaming pass 2: rescale a tile by the per-channel attention (native dtype)."""
    x = x_ref[...]                                                      # (1, C, T)
    o_ref[...] = x * attn_ref[...].astype(x.dtype)


# ---------------------------------------------------------------------------
# Wrapper helpers
# ---------------------------------------------------------------------------
def _vmem_capacity_bytes():
    """Physical VMEM size (generation-aware); conservative fallback of 64 MiB."""
    try:
        info = pltpu.get_tpu_info()
        cap = getattr(info, "vmem_capacity_bytes", None)
        if cap:
            return int(cap)
    except Exception:
        pass
    return 64 * 1024 * 1024


def _pick_tile(hw, c, itemsize, target_bytes):
    """Largest multiple-of-128 lane tile whose (C, T) block fits ~target_bytes.

    No exact-divisor requirement: the grids use cdiv and the pool kernel masks
    the padded lanes of the last tile.
    """
    if hw <= 128:
        return hw
    lanes = (target_bytes // max(1, c * itemsize)) // 128 * 128
    lanes = max(128, int(lanes))
    if lanes >= hw:
        return hw                      # single full-extent tile
    return lanes


# ---------------------------------------------------------------------------
# Wrapper
# ---------------------------------------------------------------------------
def se_block(x_nchw, w1, b1, w2, b2, *, spatial_tile=None, force_two_pass=False):
    """SEBlock forward.

    x_nchw: (N, C, H, W).
    w1: (C, Cmid), b1: (1, Cmid), w2: (Cmid, C), b2: (1, C)
    (PyTorch 1x1 conv weights (out, in, 1, 1) stored as transposed (in, out) matrices).
    """
    N, C, H, W = x_nchw.shape
    HW = H * W
    Cmid = w1.shape[1]

    # Free view: channels on sublanes, spatial on lanes. No transpose, no HBM traffic.
    x = x_nchw.reshape(N, C, HW)

    # Kernel-friendly parameter layouts (all fp32, C kept on sublanes, tiny arrays).
    w1f = w1.astype(jnp.float32).reshape(C, Cmid)            # (C, Cmid)
    b1f = b1.astype(jnp.float32).reshape(1, Cmid)            # (1, Cmid)
    w2t = w2.astype(jnp.float32).reshape(Cmid, C).T          # (C, Cmid)
    b2c = b2.astype(jnp.float32).reshape(1, C).T             # (C, 1)

    cap = _vmem_capacity_bytes()
    vmem_limit = max(32 * 2**20, min((cap * 3) // 4, 110 * 2**20))
    itemsize = x.dtype.itemsize

    # ---- Fused single-pass path: pool + MLP + rescale in one kernel ---------
    # Footprint estimate: double-buffered in + out slabs plus fp32 temporaries.
    slab = C * HW * itemsize
    fused_need = 4 * slab + 2 * C * HW * 4 + (2 << 20)
    if (not force_two_pass) and spatial_tile is None and fused_need <= vmem_limit:
        out = pl.pallas_call(
            functools.partial(_fused_kernel, inv_hw=1.0 / HW),
            out_shape=jax.ShapeDtypeStruct((N, C, HW), x.dtype),
            grid_spec=pltpu.PrefetchScalarGridSpec(
                num_scalar_prefetch=0,
                grid=(N,),
                in_specs=[
                    pl.BlockSpec((1, C, HW), lambda n: (n, 0, 0)),
                    pl.BlockSpec((C, Cmid), lambda n: (0, 0)),
                    pl.BlockSpec((1, Cmid), lambda n: (0, 0)),
                    pl.BlockSpec((C, Cmid), lambda n: (0, 0)),
                    pl.BlockSpec((C, 1), lambda n: (0, 0)),
                ],
                out_specs=pl.BlockSpec((1, C, HW), lambda n: (n, 0, 0)),
            ),
            compiler_params=pltpu.CompilerParams(
                dimension_semantics=("parallel",),
                vmem_limit_bytes=vmem_limit,
            ),
        )(x, w1f, b1f, w2t, b2c)
        return out.reshape(N, C, H, W)

    # ---- Streaming two-pass path --------------------------------------------
    big_vmem = cap >= 100 * 2**20                 # v5e/v6e (128 MiB) vs v7x (64 MiB)
    t1 = spatial_tile if spatial_tile is not None else _pick_tile(HW, C, itemsize, 8 * 2**20)
    t2 = spatial_tile if spatial_tile is not None else _pick_tile(
        HW, C, itemsize, (8 if big_vmem else 4) * 2**20)
    nt1 = pl.cdiv(HW, t1)
    nt2 = pl.cdiv(HW, t2)
    mask1 = (HW % t1) != 0

    # Pass 1: tiled global sum over the spatial (lane) axis; excitation MLP +
    # hard-sigmoid folded into the last grid step -> attn (N, C, 1) fp32.
    attn = pl.pallas_call(
        functools.partial(_pool_attn_kernel, hw=HW, tile=t1, mask=mask1),
        out_shape=jax.ShapeDtypeStruct((N, C, 1), jnp.float32),
        grid_spec=pltpu.PrefetchScalarGridSpec(
            num_scalar_prefetch=0,
            grid=(N, nt1),
            in_specs=[
                pl.BlockSpec((1, C, t1), lambda n, t: (n, 0, t)),
                pl.BlockSpec((C, Cmid), lambda n, t: (0, 0)),
                pl.BlockSpec((1, Cmid), lambda n, t: (0, 0)),
                pl.BlockSpec((C, Cmid), lambda n, t: (0, 0)),
                pl.BlockSpec((C, 1), lambda n, t: (0, 0)),
            ],
            out_specs=pl.BlockSpec((1, C, 1), lambda n, t: (n, 0, 0)),
            scratch_shapes=[pltpu.VMEM((1, C, 1), jnp.float32)],
        ),
        compiler_params=pltpu.CompilerParams(
            dimension_semantics=("parallel", "arbitrary"),
            vmem_limit_bytes=vmem_limit,
        ),
    )(x, w1f, b1f, w2t, b2c)

    # Pass 2: stream x tiles and rescale by the per-channel attention.
    # Partial last tile: out-of-range reads are harmless, writes are clipped.
    out = pl.pallas_call(
        _scale_kernel,
        out_shape=jax.ShapeDtypeStruct((N, C, HW), x.dtype),
        grid_spec=pltpu.PrefetchScalarGridSpec(
            num_scalar_prefetch=0,
            grid=(N, nt2),
            in_specs=[
                pl.BlockSpec((1, C, t2), lambda n, t: (n, 0, t)),
                pl.BlockSpec((1, C, 1), lambda n, t: (n, 0, 0)),
            ],
            out_specs=pl.BlockSpec((1, C, t2), lambda n, t: (n, 0, t)),
        ),
        compiler_params=pltpu.CompilerParams(
            dimension_semantics=("parallel", "parallel"),
            vmem_limit_bytes=vmem_limit,
        ),
    )(x, attn)

    return out.reshape(N, C, H, W)


# ---------------------------------------------------------------------------
# Pure-JAX reference mirroring the PyTorch forward
# ---------------------------------------------------------------------------
def se_block_ref(x_nchw, w1, b1, w2, b2):
    pooled = jnp.mean(x_nchw, axis=(2, 3))                    # AdaptiveAvgPool2d(1) -> (N, C)
    h = jnp.maximum(pooled @ w1 + b1, 0.0)                    # conv1 (1x1) + ReLU
    a = h @ w2 + b2                                           # conv2 (1x1)
    a = jnp.clip(1.2 * a + 3.0, 0.0, 6.0) / 6.0               # paddle hard-sigmoid
    return x_nchw * a[:, :, None, None]


if __name__ == "__main__":
    key = jax.random.PRNGKey(0)
    N, C, H, W = 2, 4, 16, 16
    ratio = 4
    Cmid = max(1, C // ratio)

    kx, k1, k2, k3, k4 = jax.random.split(key, 5)
    x = jax.random.normal(kx, (N, C, H, W), dtype=jnp.float32)

    # Synthetic parameters; PyTorch conv weight (out, in, 1, 1) -> stored (in, out).
    w1 = jax.random.normal(k1, (C, Cmid), dtype=jnp.float32) * 0.5
    b1 = jax.random.normal(k2, (1, Cmid), dtype=jnp.float32) * 0.1
    w2 = jax.random.normal(k3, (Cmid, C), dtype=jnp.float32) * 0.5
    b2 = jax.random.normal(k4, (1, C), dtype=jnp.float32) * 0.1

    ref = se_block_ref(x, w1, b1, w2, b2)

    # Fused single-pass path (per-image slab fits VMEM at this size).
    out_fused = jax.block_until_ready(se_block(x, w1, b1, w2, b2))
    # Forced two-pass streaming path (exercises the cross-tile accumulator + in-kernel MLP).
    out_stream = jax.block_until_ready(
        se_block(x, w1, b1, w2, b2, spatial_tile=128, force_two_pass=True))

    assert out_fused.shape == (N, C, H, W)
    assert jnp.allclose(out_fused, ref, atol=1e-5, rtol=1e-5), "mismatch vs reference (fused)"
    assert jnp.allclose(out_stream, ref, atol=1e-5, rtol=1e-5), "mismatch vs reference (two-pass)"

    # Ragged spatial extent (HW=132, not a multiple of the 128 tile): exercises the
    # cdiv grid + masked last tile in pass 1 and clipped writes in pass 2.
    Hr, Wr = 12, 11
    xr = jax.random.normal(kx, (N, C, Hr, Wr), dtype=jnp.float32)
    ref_r = se_block_ref(xr, w1, b1, w2, b2)
    out_r = jax.block_until_ready(
        se_block(xr, w1, b1, w2, b2, spatial_tile=128, force_two_pass=True))
    assert jnp.allclose(out_r, ref_r, atol=1e-5, rtol=1e-5), "mismatch vs reference (ragged)"

    print("KERNEL_OK")
</pallas_src>

<mosaic_0001>
module attributes {stable_mosaic.version = 11 : i64} {
  func.func @_fused_kernel(%arg0: i32, %arg1: memref<1x4x256xf32, #tpu.memory_space<vmem>>, %arg2: memref<4x1xf32, #tpu.memory_space<vmem>>, %arg3: memref<1x1xf32, #tpu.memory_space<vmem>>, %arg4: memref<4x1xf32, #tpu.memory_space<vmem>>, %arg5: memref<4x1xf32, #tpu.memory_space<vmem>>, %arg6: memref<1x4x256xf32, #tpu.memory_space<vmem>>) attributes {dimension_semantics = [#tpu.dimension_semantics<parallel>], iteration_bounds = array<i64: 2>, scalar_prefetch = 0 : i64, scratch_operands = 0 : i64, tpu.core_type = #tpu.core_type<tc>, window_params = [{transform_indices = @transform_0, window_bounds = array<i64: 1, 4, 256>}, {pipeline_mode = #tpu.pipeline_mode<synchronous>, transform_indices = @transform_1, window_bounds = array<i64: 4, 1>}, {pipeline_mode = #tpu.pipeline_mode<synchronous>, transform_indices = @transform_2, window_bounds = array<i64: 1, 1>}, {pipeline_mode = #tpu.pipeline_mode<synchronous>, transform_indices = @transform_3, window_bounds = array<i64: 4, 1>}, {pipeline_mode = #tpu.pipeline_mode<synchronous>, transform_indices = @transform_4, window_bounds = array<i64: 4, 1>}, {transform_indices = @transform_5, window_bounds = array<i64: 1, 4, 256>}]} {
    %c0 = arith.constant 0 : index
    %c0_0 = arith.constant 0 : index
    %c0_1 = arith.constant 0 : index
    %0 = vector.load %arg1[%c0, %c0_0, %c0_1] : memref<1x4x256xf32, #tpu.memory_space<vmem>>, vector<1x4x256xf32>
    %1 = vector.shape_cast %0 : vector<1x4x256xf32> to vector<4x256xf32>
    %cst = arith.constant dense<0.000000e+00> : vector<4xf32>
    %2 = vector.multi_reduction <add>, %1, %cst [1] : vector<4x256xf32> to vector<4xf32>
    %3 = vector.shape_cast %2 : vector<4xf32> to vector<4x1xf32>
    %cst_2 = arith.constant 3.906250e-03 : f32
    %4 = vector.broadcast %cst_2 : f32 to vector<4x1xf32>
    %5 = arith.mulf %3, %4 : vector<4x1xf32>
    %c0_3 = arith.constant 0 : index
    %c0_4 = arith.constant 0 : index
    %6 = vector.load %arg2[%c0_3, %c0_4] : memref<4x1xf32, #tpu.memory_space<vmem>>, vector<4x1xf32>
    %7 = arith.mulf %5, %6 : vector<4x1xf32>
    %cst_5 = arith.constant dense<0.000000e+00> : vector<1xf32>
    %8 = vector.multi_reduction <add>, %7, %cst_5 [0] : vector<4x1xf32> to vector<1xf32>
    %9 = vector.shape_cast %8 : vector<1xf32> to vector<1x1xf32>
    %c0_6 = arith.constant 0 : index
    %c0_7 = arith.constant 0 : index
    %10 = vector.load %arg3[%c0_6, %c0_7] : memref<1x1xf32, #tpu.memory_space<vmem>>, vector<1x1xf32>
    %11 = arith.addf %9, %10 : vector<1x1xf32>
    %cst_8 = arith.constant 0.000000e+00 : f32
    %12 = vector.broadcast %cst_8 : f32 to vector<1x1xf32>
    %13 = arith.maximumf %11, %12 : vector<1x1xf32>
    %c0_9 = arith.constant 0 : index
    %c0_10 = arith.constant 0 : index
    %14 = vector.load %arg4[%c0_9, %c0_10] : memref<4x1xf32, #tpu.memory_space<vmem>>, vector<4x1xf32>
    %15 = vector.broadcast %13 : vector<1x1xf32> to vector<4x1xf32>
    %16 = arith.mulf %14, %15 : vector<4x1xf32>
    %cst_11 = arith.constant dense<0.000000e+00> : vector<4xf32>
    %17 = vector.multi_reduction <add>, %16, %cst_11 [1] : vector<4x1xf32> to vector<4xf32>
    %18 = vector.shape_cast %17 : vector<4xf32> to vector<4x1xf32>
    %c0_12 = arith.constant 0 : index
    %c0_13 = arith.constant 0 : index
    %19 = vector.load %arg5[%c0_12, %c0_13] : memref<4x1xf32, #tpu.memory_space<vmem>>, vector<4x1xf32>
    %20 = arith.addf %18, %19 : vector<4x1xf32>
    %cst_14 = arith.constant 1.200000e+00 : f32
    %21 = vector.broadcast %cst_14 : f32 to vector<4x1xf32>
    %22 = arith.mulf %21, %20 : vector<4x1xf32>
    %cst_15 = arith.constant 3.000000e+00 : f32
    %23 = vector.broadcast %cst_15 : f32 to vector<4x1xf32>
    %24 = arith.addf %22, %23 : vector<4x1xf32>
    %cst_16 = arith.constant 0.000000e+00 : f32
    %cst_17 = arith.constant 6.000000e+00 : f32
    %25 = vector.broadcast %cst_16 : f32 to vector<4x1xf32>
    %26 = arith.maximumf %25, %24 : vector<4x1xf32>
    %27 = vector.broadcast %cst_17 : f32 to vector<4x1xf32>
    %28 = arith.minimumf %27, %26 : vector<4x1xf32>
    %cst_18 = arith.constant 0.166666672 : f32
    %29 = vector.broadcast %cst_18 : f32 to vector<4x1xf32>
    %30 = arith.mulf %28, %29 : vector<4x1xf32>
    %31 = vector.broadcast %30 : vector<4x1xf32> to vector<4x256xf32>
    %32 = arith.mulf %1, %31 : vector<4x256xf32>
    %c0_19 = arith.constant 0 : index
    %c0_20 = arith.constant 0 : index
    %c0_21 = arith.constant 0 : index
    %33 = vector.load %arg6[%c0_19, %c0_20, %c0_21] : memref<1x4x256xf32, #tpu.memory_space<vmem>>, vector<1x4x256xf32>
    %34 = vector.shape_cast %33 : vector<1x4x256xf32> to vector<4x256xf32>
    %35 = vector.shape_cast %32 : vector<4x256xf32> to vector<1x4x256xf32>
    tpu.vector_store %arg6[%c0_19, %c0_20, %c0_21], %35 {strides = array<i32>} : memref<1x4x256xf32, #tpu.memory_space<vmem>>, vector<1x4x256xf32>,
    return
  }
  func.func @transform_0(%arg0: i32) -> (i32, i32, i32) {
    %c0_i32 = arith.constant 0 : i32
    %c0_i32_0 = arith.constant 0 : i32
    %c0_i32_1 = arith.constant 0 : i32
    return %arg0, %c0_i32, %c0_i32_0 : i32, i32, i32
  }
  func.func @transform_1(%arg0: i32) -> (i32, i32) {
    %c0_i32 = arith.constant 0 : i32
    %c0_i32_0 = arith.constant 0 : i32
    %c0_i32_1 = arith.constant 0 : i32
    return %c0_i32, %c0_i32_0 : i32, i32
  }
  func.func @transform_2(%arg0: i32) -> (i32, i32) {
    %c0_i32 = arith.constant 0 : i32
    %c0_i32_0 = arith.constant 0 : i32
    %c0_i32_1 = arith.constant 0 : i32
    return %c0_i32, %c0_i32_0 : i32, i32
  }
  func.func @transform_3(%arg0: i32) -> (i32, i32) {
    %c0_i32 = arith.constant 0 : i32
    %c0_i32_0 = arith.constant 0 : i32
    %c0_i32_1 = arith.constant 0 : i32
    return %c0_i32, %c0_i32_0 : i32, i32
  }
  func.func @transform_4(%arg0: i32) -> (i32, i32) {
    %c0_i32 = arith.constant 0 : i32
    %c0_i32_0 = arith.constant 0 : i32
    %c0_i32_1 = arith.constant 0 : i32
    return %c0_i32, %c0_i32_0 : i32, i32
  }
  func.func @transform_5(%arg0: i32) -> (i32, i32, i32) {
    %c0_i32 = arith.constant 0 : i32
    %c0_i32_0 = arith.constant 0 : i32
    %c0_i32_1 = arith.constant 0 : i32
    return %arg0, %c0_i32, %c0_i32_0 : i32, i32, i32
  }
}

</mosaic_0001>

<llo_original>
// kernel: tpu_custom_call.1
$region0: #{tpu_custom_call.1}
  #allocation0 [shape = 'u32[]', space=smem, size = 0x4, offset = 0x4, fixed_abs, tag = 'smem constant byte address 0x4 - core index']
  #allocation1 [shape = 'u32[144,128]{1,0:T(1,128)}', space=vmem, size = 0x12000, scoped, tag = 'internal scratch']
  #allocation2 [shape = 'f32[1,1]{1,0:T(1,128)S(1)}', space=vmem, size = 0x200, scoped, tag = 'scoped memory for tpu_custom_call.1']
  %s0 = inlined_call_operand.vmem [shape: f32[2,4,256], index: 0, kind: input, shape index: {}]
  %s1 = inlined_call_operand.vmem [shape: f32[4,1], index: 1, kind: input, shape index: {}]
  %s2 = inlined_call_operand.<no memory space> [shape: f32[1,1], index: 2, kind: input, shape index: {}]
  %s3 = inlined_call_operand.vmem [shape: f32[4,1], index: 3, kind: input, shape index: {}]
  %s4 = inlined_call_operand.vmem [shape: f32[4,1], index: 4, kind: input, shape index: {}]
  %s5 = inlined_call_operand.hbm [shape: f32[2,4,256], index: 5, kind: output, shape index: {}]
  %s6 = sld [smem:[#allocation0]]
  $region53: #{tpu_custom_call.1} parent=0
    _
  %s8 = ssub.s32 1, %s6
  %s9 = scalar_select 0, %s8, %s6
  %v10 = vstv %s2
  %11 = vst [vmem:[#allocation2] sm:$0x1] %v10
  $region1: #{tpu_custom_call.1} parent=0
    #allocation3 [shape = 'u8[8192]{0}', space=vmem, size = 0x2000, scoped, tag = 'output window, operand 0']
    #allocation4 [shape = 's32[2]{0}', space=sflag, size = 0x8, scoped, tag = 'scoped memory for tpu_custom_call.1']
    %12 = vsyncpa [#allocation4], 0
    %s13 = scalar_lea.sflag [#allocation4], 1
    %14 = vsyncpa %s13, 0
    loop: start=0, step=1, limit=4
    $region2: #{tpu_custom_call.1} parent=1 // loop_pre_header
      _
    $region3: #{tpu_custom_call.1} parent=1 // loop_header
      %s16 = sphi 0, %s20
      %p17 = scmp.ge.s32.totalorder %s16, 4
      %s26 = sphi 0, %s28
      %s29 = sphi 0, %s26
      %s30 = sphi 0, %s29
      %s46 = sphi 0, %s30
      %s50 = sphi 0, %s50
      %s52 = sphi 0, %s50
      %s53 = sphi 0, %s52
      %s67 = sphi 0, %s53
      %s71 = sphi 0, %s71
      %s73 = sphi 0, %s71
      %s74 = sphi 0, %s73
      %s88 = sphi 0, %s74
      %s92 = sphi 0, %s92
      %s94 = sphi 0, %s92
      %s95 = sphi 0, %s94
      %s109 = sphi 0, %s95
      %s113 = sphi 0, %s113
      %s115 = sphi 0, %s113
      %s116 = sphi 0, %s115
      %s130 = sphi 0, %s116
      %s136 = sphi 0, %s138
      %s139 = sphi 0, %s136
      %s140 = sphi 0, %s139
      %s156 = sphi 0, %s140
    $region4: #{tpu_custom_call.1} parent=1 // loop_header_branch
      %19 = sbr.rel (%p17) target = $region8
    $region5: #{tpu_custom_call.1} parent=1 // loop_body
      %s21 = ssub.s32 %s16, 1
      %s22 = ssub.s32 %s16, 2
      %s23 = sadd.s32 %s16, 1
      %s24 = ssub.s32 %s16, %s23
      %p25 = scmp.eq.s32.totalorder %s24, 0
      %s27 = sadd.s32 %s26, 1
      %s28 = scalar_select %p25, %s26, %s27
      %p31 = pneg %p25
      %p32 = scmp.eq.s32.totalorder %s16, 1
      %p33 = por %p31, %p32
      %p34 = scmp.ne.s32.totalorder %s26, %s29
      %p35 = scmp.eq.s32.totalorder %s16, 0
      %p36 = por %p34, %p35
      %p37 = scmp.ne.s32.totalorder %s26, %s29
      %p38 = scmp.eq.s32.totalorder %s21, 1
      %p39 = por %p37, %p38
      %p40 = scmp.ne.s32.totalorder %s29, %s30
      %p41 = scmp.eq.s32.totalorder %s21, 0
      %p42 = por %p40, %p41
      %p43 = scmp.ne.s32.totalorder %s29, %s30
      %p44 = scmp.eq.s32.totalorder %s22, 1
      %p45 = por %p43, %p44
      %p47 = scmp.ne.s32.totalorder %s30, %s46
      %p48 = scmp.eq.s32.totalorder %s22, 0
      %p49 = por %p47, %p48
      %s51 = sadd.s32 %s50, 1
      %p54 = scmp.eq.s32.totalorder %s16, 1
      %p55 = scmp.ne.s32.totalorder %s50, %s52
      %p56 = scmp.eq.s32.totalorder %s16, 0
      %p57 = por %p55, %p56
      %p58 = scmp.ne.s32.totalorder %s50, %s52
      %p59 = scmp.eq.s32.totalorder %s21, 1
      %p60 = por %p58, %p59
      %p61 = scmp.ne.s32.totalorder %s52, %s53
      %p62 = scmp.eq.s32.totalorder %s21, 0
      %p63 = por %p61, %p62
      %p64 = scmp.ne.s32.totalorder %s52, %s53
      %p65 = scmp.eq.s32.totalorder %s22, 1
      %p66 = por %p64, %p65
      %p68 = scmp.ne.s32.totalorder %s53, %s67
      %p69 = scmp.eq.s32.totalorder %s22, 0
      %p70 = por %p68, %p69
      %s72 = sadd.s32 %s71, 1
      %p75 = scmp.eq.s32.totalorder %s16, 1
      %p76 = scmp.ne.s32.totalorder %s71, %s73
      %p77 = scmp.eq.s32.totalorder %s16, 0
      %p78 = por %p76, %p77
      %p79 = scmp.ne.s32.totalorder %s71, %s73
      %p80 = scmp.eq.s32.totalorder %s21, 1
      %p81 = por %p79, %p80
      %p82 = scmp.ne.s32.totalorder %s73, %s74
      %p83 = scmp.eq.s32.totalorder %s21, 0
      %p84 = por %p82, %p83
      %p85 = scmp.ne.s32.totalorder %s73, %s74
      %p86 = scmp.eq.s32.totalorder %s22, 1
      %p87 = por %p85, %p86
      %p89 = scmp.ne.s32.totalorder %s74, %s88
      %p90 = scmp.eq.s32.totalorder %s22, 0
      %p91 = por %p89, %p90
      %s93 = sadd.s32 %s92, 1
      %p96 = scmp.eq.s32.totalorder %s16, 1
      %p97 = scmp.ne.s32.totalorder %s92, %s94
      %p98 = scmp.eq.s32.totalorder %s16, 0
      %p99 = por %p97, %p98
      %p100 = scmp.ne.s32.totalorder %s92, %s94
      %p101 = scmp.eq.s32.totalorder %s21, 1
      %p102 = por %p100, %p101
      %p103 = scmp.ne.s32.totalorder %s94, %s95
      %p104 = scmp.eq.s32.totalorder %s21, 0
      %p105 = por %p103, %p104
      %p106 = scmp.ne.s32.totalorder %s94, %s95
      %p107 = scmp.eq.s32.totalorder %s22, 1
      %p108 = por %p106, %p107
      %p110 = scmp.ne.s32.totalorder %s95, %s109
      %p111 = scmp.eq.s32.totalorder %s22, 0
      %p112 = por %p110, %p111
      %s114 = sadd.s32 %s113, 1
      %p117 = scmp.eq.s32.totalorder %s16, 1
      %p118 = scmp.ne.s32.totalorder %s113, %s115
      %p119 = scmp.eq.s32.totalorder %s16, 0
      %p120 = por %p118, %p119
      %p121 = scmp.ne.s32.totalorder %s113, %s115
      %p122 = scmp.eq.s32.totalorder %s21, 1
      %p123 = por %p121, %p122
      %p124 = scmp.ne.s32.totalorder %s115, %s116
      %p125 = scmp.eq.s32.totalorder %s21, 0
      %p126 = por %p124, %p125
      %p127 = scmp.ne.s32.totalorder %s115, %s116
      %p128 = scmp.eq.s32.totalorder %s22, 1
      %p129 = por %p127, %p128
      %p131 = scmp.ne.s32.totalorder %s116, %s130
      %p132 = scmp.eq.s32.totalorder %s22, 0
      %p133 = por %p131, %p132
      %s134 = ssub.s32 %s16, %s23
      %p135 = scmp.eq.s32.totalorder %s134, 0
      %s137 = sadd.s32 %s136, 1
      %s138 = scalar_select %p135, %s136, %s137
      %p141 = pneg %p135
      %p142 = scmp.eq.s32.totalorder %s16, 1
      %p143 = por %p141, %p142
      %p144 = scmp.ne.s32.totalorder %s136, %s139
      %p145 = scmp.eq.s32.totalorder %s16, 0
      %p146 = por %p144, %p145
      %p147 = scmp.ne.s32.totalorder %s136, %s139
      %p148 = scmp.eq.s32.totalorder %s21, 1
      %p149 = por %p147, %p148
      %p150 = scmp.ne.s32.totalorder %s139, %s140
      %p151 = scmp.eq.s32.totalorder %s21, 0
      %p152 = por %p150, %p151
      %p153 = scmp.ne.s32.totalorder %s139, %s140
      %p154 = scmp.eq.s32.totalorder %s22, 1
      %p155 = por %p153, %p154
      %p157 = scmp.ne.s32.totalorder %s140, %s156
      %p158 = scmp.eq.s32.totalorder %s22, 0
      %p159 = por %p157, %p158
      %p160 = scmp.le.s32.totalorder 1, %s16
      %p161 = scmp.lt.s32.totalorder %s16, 3
      %p162 = pnand %p160, %p161
      %p163 = pneg %p162
      // Predicated region
      $region9: #{tpu_custom_call.1} parent=5 // pred_check
        _
      $region10: #{tpu_custom_call.1} parent=5 // pred_check_branch
        %165 = sbr.rel (%p162) target = $region12
      $region11: #{tpu_custom_call.1} parent=5 // pred_region
        %s166 = ssub.s32 %s16, 1
        // Predicated region
        $region13: #{tpu_custom_call.1} parent=11 // pred_check
          %p167 = pneg %p63
        $region14: #{tpu_custom_call.1} parent=11 // pred_check_branch
          %169 = sbr.rel (%p167) target = $region16
        $region15: #{tpu_custom_call.1} parent=11 // pred_region
          _
        $region16: #{tpu_custom_call.1} parent=11 // pred_fallthru
          _
        // Predicated region
        $region17: #{tpu_custom_call.1} parent=11 // pred_check
          %p170 = pneg %p84
        $region18: #{tpu_custom_call.1} parent=11 // pred_check_branch
          %172 = sbr.rel (%p170) target = $region20
        $region19: #{tpu_custom_call.1} parent=11 // pred_region
          _
        $region20: #{tpu_custom_call.1} parent=11 // pred_fallthru
          _
        // Predicated region
        $region21: #{tpu_custom_call.1} parent=11 // pred_check
          %p173 = pneg %p105
        $region22: #{tpu_custom_call.1} parent=11 // pred_check_branch
          %175 = sbr.rel (%p173) target = $region24
        $region23: #{tpu_custom_call.1} parent=11 // pred_region
          _
        $region24: #{tpu_custom_call.1} parent=11 // pred_fallthru
          _
        // Predicated region
        $region25: #{tpu_custom_call.1} parent=11 // pred_check
          %p176 = pneg %p126
        $region26: #{tpu_custom_call.1} parent=11 // pred_check_branch
          %178 = sbr.rel (%p176) target = $region28
        $region27: #{tpu_custom_call.1} parent=11 // pred_region
          _
        $region28: #{tpu_custom_call.1} parent=11 // pred_fallthru
          _
      $region12: #{tpu_custom_call.1} parent=5 // pred_fallthru
        _
      %p179 = scmp.lt.s32.totalorder %s16, 2
      // Predicated region
      $region29: #{tpu_custom_call.1} parent=5 // pred_check
        %p180 = pneg %p179
      $region30: #{tpu_custom_call.1} parent=5 // pred_check_branch
        %182 = sbr.rel (%p180) target = $region32
      $region31: #{tpu_custom_call.1} parent=5 // pred_region
        // Predicated region
        $region33: #{tpu_custom_call.1} parent=31 // pred_check
          %p183 = pneg %p36
        $region34: #{tpu_custom_call.1} parent=31 // pred_check_branch
          %185 = sbr.rel (%p183) target = $region36
        $region35: #{tpu_custom_call.1} parent=31 // pred_region
          %p186 = scmp.lt.s32.totalorder %s16, 1
          %s187 = scalar_select %p186, %s16, 1
          %s188 = smul.addr %s187, 2
          %s189 = smul.addr %s188, 4
          %s190 = scalar_lea.vmem %s0, %s189
        $region36: #{tpu_custom_call.1} parent=31 // pred_fallthru
          _
      $region32: #{tpu_custom_call.1} parent=5 // pred_fallthru
        _
      %p191 = scmp.le.s32.totalorder 1, %s16
      %p192 = scmp.lt.s32.totalorder %s16, 3
      %p193 = pnand %p191, %p192
      %p194 = pneg %p193
      // Predicated region
      $region37: #{tpu_custom_call.1} parent=5 // pred_check
        _
      $region38: #{tpu_custom_call.1} parent=5 // pred_check_branch
        %196 = sbr.rel (%p193) target = $region40
      $region39: #{tpu_custom_call.1} parent=5 // pred_region
        %s197 = ssub.s32 %s16, 1
        %p198 = scmp.lt.s32.totalorder %s21, 1
        %s199 = scalar_select %p198, %s21, 1
        %s200 = smul.addr %s199, 2
        %s201 = smul.addr %s200, 4
        %s202 = scalar_lea.vmem %s0, %s201
        %p203 = pneg %p42
        %p204 = pneg %p39
        %p205 = pneg %p63
        %p206 = pneg %p60
        %p207 = pneg %p84
        %p208 = pneg %p81
        %p209 = pneg %p105
        %p210 = pneg %p102
        %p211 = pneg %p126
        %p212 = pneg %p123
        %p213 = pneg %p152
        %p214 = pneg %p149
        %s215 = sand.u32 %s139, 1
        %s216 = scalar_lea.sflag [#allocation4], %s215
        %s217 = sand.u32 %s139, 1
        %s218 = smul.addr %s217, 8
        %s219 = scalar_lea.vmem [#allocation3], %s218
        %p220 = scmp.lt.s32.totalorder %s21, 1
        %s221 = scalar_select %p220, %s21, 1
        %s222 = smul.addr %s221, 2
        %s223 = smul.addr %s222, 4
        %s224 = scalar_lea.vmem %s0, %s223
        %v225 = vld [vmem:[%s224] sm:$0xff]
        %v227 = vcombine.high %v225, %v225
        %vm229 = vcmask 1043456
        %v230 = vsel %vm229, %v225, 0.0
        %v231 = vsel %vm229, %v227, 0.0
        %v232 = vadd.f32 %v230, %v231
        %233 = vadd.xlane.f32.xlu0 %v232
        %v234 = vpop.xlane.xlu0 %233
        %v235 = vmul.f32 %v234, 0.00390625
        %v236 = vld [vmem:[%s1] sm:$0xf]
        %v237 = vmul.f32 %v235, %v236
        %vm238 = vcmask 3072
        %v239 = vsel %vm238, %v237, 0.0
        %v240 = vrot.slane %v239, 4
        %v241 = vadd.f32 %v239, %v240
        %v242 = vrot.slane %v241, 2
        %v243 = vadd.f32 %v241, %v242
        %v244 = vrot.slane %v243, 1
        %v245 = vadd.f32 %v243, %v244
        %v246 = vld [vmem:[#allocation2] sm:$0x1]
        %v247 = vadd.f32 %v245, %v246
        %v248 = vmax.f32 %v247, 0.0
        %v249 = vld [vmem:[%s3] sm:$0xf]
        %v250 = vlaneseq
        %v251 = vshrl.u32 %v250, 7
        %v252 = vsub.s32 0, %v251
        %v253 = vrot.slane %v248, %v252
        %v254 = vmul.f32 %v249, %v253
        %v255 = vadd.f32 %v254, 0.0
        %v256 = vld [vmem:[%s4] sm:$0xf]
        %v257 = vadd.f32 %v255, %v256
        %v258 = vmul.f32 %v257, 1.2
        %v259 = vadd.f32 %v258, 3.0
        %v260 = vmax.f32 %v259, 0.0
        %v261 = vmin.f32 %v260, 6.0
        %v262 = vmul.f32 %v261, 0.16666667
        %264 = vset.pattern.permute.xlu0 0
        %265 = vperm.xlu0 %264, %v262
        %v266 = vpop.permute.xlu0 %265
        %v268 = vunpack.c.l.s4 839922192
        %v269 = vunpack.c.0.s8 %v268
        %v270 = vlaneseq
        %v271 = vshrl.u32 %v270, 7
        %v272 = vsub.s32 %v269, %v271
        %v273 = vrot.slane %v266, %v272
        %v275 = vmul.f32 %v225, %v273
        %276 = vst [vmem:[%s219] sm:$0xff] %v275
        %s277 = sand.u32 %s139, 1
        %s278 = scalar_lea.sflag [#allocation4], %s277
        %s279 = sand.u32 %s139, 1
        %s280 = smul.addr %s279, 8
        %s281 = scalar_lea.vmem [#allocation3], %s280
        // Predicated region
        $region41: #{tpu_custom_call.1} parent=39 // pred_check
          %p282 = pneg %p149
        $region42: #{tpu_custom_call.1} parent=39 // pred_check_branch
          %284 = sbr.rel (%p282) target = $region44
        $region43: #{tpu_custom_call.1} parent=39 // pred_region
          %s286 = ssub.s32 128, 128
          %287 = vsyncadd %s278, %s286
          %s288 = smul.addr %s21, 2
          %s289 = smul.addr %s288, 64
          %s290 = scalar_lea.hbm %s5, %s289
          %s292 = sshll.u32 %s281, 4
          %s293 = int_to_ptr.vmem [resolvable:$true] %s292
          %295 = dma.vmem_to_hbm [thread:$0]  %s293, 128, %s290, %s278
        $region44: #{tpu_custom_call.1} parent=39 // pred_fallthru
          _
      $region40: #{tpu_custom_call.1} parent=5 // pred_fallthru
        _
      %p296 = scmp.le.s32.totalorder 2, %s16
      // Predicated region
      $region45: #{tpu_custom_call.1} parent=5 // pred_check
        %p297 = pneg %p296
      $region46: #{tpu_custom_call.1} parent=5 // pred_check_branch
        %299 = sbr.rel (%p297) target = $region48
      $region47: #{tpu_custom_call.1} parent=5 // pred_region
        %s300 = ssub.s32 %s16, 2
        // Predicated region
        $region49: #{tpu_custom_call.1} parent=47 // pred_check
          %p301 = pneg %p155
        $region50: #{tpu_custom_call.1} parent=47 // pred_check_branch
          %303 = sbr.rel (%p301) target = $region52
        $region51: #{tpu_custom_call.1} parent=47 // pred_region
          %s304 = sand.u32 %s140, 1
          %s305 = scalar_lea.sflag [#allocation4], %s304
          %s306 = sand.u32 %s140, 1
          %s307 = smul.addr %s306, 8
          %s308 = scalar_lea.vmem [#allocation3], %s307
          %309 = dma.done %s305, 128
        $region52: #{tpu_custom_call.1} parent=47 // pred_fallthru
          _
      $region48: #{tpu_custom_call.1} parent=5 // pred_fallthru
        _
    $region6: #{tpu_custom_call.1} parent=1 // loop_footer
      %s20 = sadd.s32 1, %s16
    $region7: #{tpu_custom_call.1} parent=1 // loop_footer_branch
      %15 = sbr.rel target = $region3
    $region8: #{tpu_custom_call.1} parent=1 // loop_exit
      _
    %310 = vsyncpa [#allocation4], 1
    %s311 = scalar_lea.sflag [#allocation4], 1
    %312 = vsyncpa %s311, 1

</llo_original>
